<compile_context>
chip_gen: v5e
topology: v5e:2x2
jax: 0.10.0
libtpu: 0.0.40
codegen_flags: <defaults>
</compile_context>

<pallas_src>
import jax
import jax.numpy as jnp
from jax.experimental import pallas as pl
from jax.experimental.pallas import tpu as pltpu

H1 = 128        # fc1 out (already lane-dense)
H2_PAD = 128    # fc2 out (64) padded to 128 lanes
OUT_PAD = 128   # output_size padded to 128 lanes

_CORE_PARALLEL = getattr(pltpu, "CORE_PARALLEL", None)


def _round_up(n, m):
    return (n + m - 1) // m * m


def mlp_kernel(x_ref, w1_ref, b1_ref, w2_ref, b2_ref, w3_ref, b3_ref, o_ref):
    """One batch tile of the MLP.  Weights are VMEM-resident; bf16 MXU inputs,
    f32 accumulation and f32 bias/ReLU (v5e-safe), bf16 lane-dense writeback."""
    x = x_ref[...].astype(jnp.bfloat16)                       # (tile_b, in_size)
    # fc1 + ReLU   (dropout = identity in eval mode)
    h1 = jnp.dot(x, w1_ref[...], preferred_element_type=jnp.float32)
    h1 = jnp.maximum(h1 + b1_ref[...], 0.0)
    # fc2 + ReLU   (dropout = identity in eval mode)
    h2 = jnp.dot(h1.astype(jnp.bfloat16), w2_ref[...],
                 preferred_element_type=jnp.float32)
    h2 = jnp.maximum(h2 + b2_ref[...], 0.0)
    # fc3 (no activation)
    out = jnp.dot(h2.astype(jnp.bfloat16), w3_ref[...],
                  preferred_element_type=jnp.float32)
    o_ref[...] = (out + b3_ref[...]).astype(o_ref.dtype)      # bf16 store


def chatbot_forward(x, params, output_size, *, tile_b=8192):
    """x: [B, input_size] f32.  params: padded/cast params from pad_params()."""
    w1, b1, w2, b2, w3, b3 = params
    B, in_size = x.shape

    # Batch tiling: multiple of 8 sublanes; prefer >=2 grid steps so the batch
    # axis can actually shard across TensorCores on v7x.
    b8 = _round_up(max(B, 8), 8)
    tile_b = max(8, _round_up(min(tile_b, b8), 8))
    if b8 // tile_b < 2 and b8 >= 16:
        tile_b = _round_up((b8 + 1) // 2, 8)
    b_pad = _round_up(B, tile_b)
    steps = b_pad // tile_b

    if b_pad != B:
        x = jnp.pad(x, ((0, b_pad - B), (0, 0)))   # zero rows, sliced off below

    def call(sem):
        return pl.pallas_call(
            mlp_kernel,
            out_shape=jax.ShapeDtypeStruct((b_pad, OUT_PAD), jnp.bfloat16),
            grid=(steps,),
            in_specs=[
                # streamed x tile, unpadded feature dim (full-array last dim)
                pl.BlockSpec((tile_b, in_size), lambda i: (i, 0)),
                # weights/biases: constant index -> DMA'd once, VMEM-resident
                pl.BlockSpec(w1.shape, lambda i: (0, 0)),
                pl.BlockSpec(b1.shape, lambda i: (0, 0)),
                pl.BlockSpec(w2.shape, lambda i: (0, 0)),
                pl.BlockSpec(b2.shape, lambda i: (0, 0)),
                pl.BlockSpec(w3.shape, lambda i: (0, 0)),
                pl.BlockSpec(b3.shape, lambda i: (0, 0)),
            ],
            out_specs=pl.BlockSpec((tile_b, OUT_PAD), lambda i: (i, 0)),
            compiler_params=pltpu.CompilerParams(
                dimension_semantics=(sem,),
                vmem_limit_bytes=48 << 20),
        )(x, w1, b1, w2, b2, w3, b3)

    sem = _CORE_PARALLEL if (_CORE_PARALLEL is not None and steps >= 2) else "parallel"
    try:
        out = call(sem)
    except Exception:
        if sem == "parallel":
            raise
        out = call("parallel")   # compiler/chip without core-parallel support

    # Narrow slice + upcast in XLA (touches only the real 16 columns).
    return out[:B, :output_size].astype(jnp.float32)


def init_params(key, input_size, output_size):
    """PyTorch-style init U(-1/sqrt(fan_in), 1/sqrt(fan_in)) at logical shapes,
    weights kept as (in, out)."""
    dims = [(input_size, 128), (128, 64), (64, output_size)]
    params = []
    for fan_in, fan_out in dims:
        key, kw, kb = jax.random.split(key, 3)
        bound = 1.0 / jnp.sqrt(float(fan_in))
        w = jax.random.uniform(kw, (fan_in, fan_out), jnp.float32, -bound, bound)
        b = jax.random.uniform(kb, (fan_out,), jnp.float32, -bound, bound)
        params += [w, b]
    return params


def pad_params(w1, b1, w2, b2, w3, b3):
    """Zero-pad output feature dims to 128 lanes; weights -> bf16 (in, out),
    biases -> f32 (1, 128).  fc1 keeps its real input_size rows (x is unpadded)."""
    def pad_w(w, rows, cols):
        wp = jnp.zeros((rows, cols), jnp.float32)
        wp = wp.at[: w.shape[0], : w.shape[1]].set(w)
        return wp.astype(jnp.bfloat16)

    def pad_b(b, cols):
        bp = jnp.zeros((1, cols), jnp.float32)
        return bp.at[0, : b.shape[0]].set(b)

    in_size = w1.shape[0]
    return (pad_w(w1, in_size, H1),      pad_b(b1, H1),
            pad_w(w2, H1, H2_PAD),       pad_b(b2, H2_PAD),
            pad_w(w3, H2_PAD, OUT_PAD),  pad_b(b3, OUT_PAD))


def reference_forward(x, w1, b1, w2, b2, w3, b3):
    h1 = jnp.maximum(x @ w1 + b1, 0.0)
    h2 = jnp.maximum(h1 @ w2 + b2, 0.0)
    return h2 @ w3 + b3


if __name__ == "__main__":
    key = jax.random.PRNGKey(0)
    input_size, output_size = 32, 16

    raw = init_params(key, input_size, output_size)
    params = pad_params(*raw)

    # Small single-tile correctness check.
    key, kx = jax.random.split(key)
    x = jax.random.normal(kx, (8, input_size), jnp.float32)
    out = jax.block_until_ready(chatbot_forward(x, params, output_size))
    ref = reference_forward(x, *raw)
    assert out.shape == (8, output_size)
    err = float(jnp.max(jnp.abs(out - ref)))
    assert jnp.allclose(out, ref, atol=3e-2, rtol=3e-2), err

    # Multi-tile check: exercises batch padding, software pipelining and the
    # core-parallel grid path (tile_b=64 -> batch 200 pads to 256, 4 grid steps).
    key, kx = jax.random.split(key)
    x2 = jax.random.normal(kx, (200, input_size), jnp.float32)
    out2 = jax.block_until_ready(chatbot_forward(x2, params, output_size, tile_b=64))
    ref2 = reference_forward(x2, *raw)
    assert out2.shape == (200, output_size)
    err2 = float(jnp.max(jnp.abs(out2 - ref2)))
    assert jnp.allclose(out2, ref2, atol=3e-2, rtol=3e-2), err2

    print("KERNEL_OK")
</pallas_src>

<mosaic_0001>
module attributes {stable_mosaic.version = 11 : i64} {
  func.func @mlp_kernel(%arg0: i32, %arg1: memref<8x32xf32, #tpu.memory_space<vmem>>, %arg2: memref<32x128xbf16, #tpu.memory_space<vmem>>, %arg3: memref<1x128xf32, #tpu.memory_space<vmem>>, %arg4: memref<128x128xbf16, #tpu.memory_space<vmem>>, %arg5: memref<1x128xf32, #tpu.memory_space<vmem>>, %arg6: memref<128x128xbf16, #tpu.memory_space<vmem>>, %arg7: memref<1x128xf32, #tpu.memory_space<vmem>>, %arg8: memref<8x128xbf16, #tpu.memory_space<vmem>>) attributes {dimension_semantics = [#tpu.dimension_semantics<parallel>], iteration_bounds = array<i64: 1>, scalar_prefetch = 0 : i64, scratch_operands = 0 : i64, tpu.core_type = #tpu.core_type<tc>, window_params = [{transform_indices = @transform_0, window_bounds = array<i64: 8, 32>}, {pipeline_mode = #tpu.pipeline_mode<synchronous>, transform_indices = @transform_1, window_bounds = array<i64: 32, 128>}, {pipeline_mode = #tpu.pipeline_mode<synchronous>, transform_indices = @transform_2, window_bounds = array<i64: 1, 128>}, {pipeline_mode = #tpu.pipeline_mode<synchronous>, transform_indices = @transform_3, window_bounds = array<i64: 128, 128>}, {pipeline_mode = #tpu.pipeline_mode<synchronous>, transform_indices = @transform_4, window_bounds = array<i64: 1, 128>}, {pipeline_mode = #tpu.pipeline_mode<synchronous>, transform_indices = @transform_5, window_bounds = array<i64: 128, 128>}, {pipeline_mode = #tpu.pipeline_mode<synchronous>, transform_indices = @transform_6, window_bounds = array<i64: 1, 128>}, {transform_indices = @transform_7, window_bounds = array<i64: 8, 128>}]} {
    %c0 = arith.constant 0 : index
    %c0_0 = arith.constant 0 : index
    %0 = vector.load %arg1[%c0, %c0_0] : memref<8x32xf32, #tpu.memory_space<vmem>>, vector<8x32xf32>
    %1 = arith.truncf %0 : vector<8x32xf32> to vector<8x32xbf16>
    %c0_1 = arith.constant 0 : index
    %c0_2 = arith.constant 0 : index
    %2 = vector.load %arg2[%c0_1, %c0_2] : memref<32x128xbf16, #tpu.memory_space<vmem>>, vector<32x128xbf16>
    %cst = arith.constant dense<0.000000e+00> : vector<8x128xf32>
    %3 = tpu.matmul %1, %2, %cst {dimension_numbers = #tpu.dot_dimension_numbers<[1], [0], [0], [1], [0, 0, 1, 1], [], []>} : vector<8x32xbf16>, vector<32x128xbf16>, vector<8x128xf32> -> vector<8x128xf32>
    %c0_3 = arith.constant 0 : index
    %c0_4 = arith.constant 0 : index
    %4 = vector.load %arg3[%c0_3, %c0_4] : memref<1x128xf32, #tpu.memory_space<vmem>>, vector<1x128xf32>
    %5 = vector.broadcast %4 : vector<1x128xf32> to vector<8x128xf32>
    %6 = arith.addf %3, %5 : vector<8x128xf32>
    %cst_5 = arith.constant 0.000000e+00 : f32
    %7 = vector.broadcast %cst_5 : f32 to vector<8x128xf32>
    %8 = arith.maximumf %6, %7 : vector<8x128xf32>
    %9 = arith.truncf %8 : vector<8x128xf32> to vector<8x128xbf16>
    %c0_6 = arith.constant 0 : index
    %c0_7 = arith.constant 0 : index
    %10 = vector.load %arg4[%c0_6, %c0_7] : memref<128x128xbf16, #tpu.memory_space<vmem>>, vector<128x128xbf16>
    %cst_8 = arith.constant dense<0.000000e+00> : vector<8x128xf32>
    %11 = tpu.matmul %9, %10, %cst_8 {dimension_numbers = #tpu.dot_dimension_numbers<[1], [0], [0], [1], [0, 0, 1, 1], [], []>} : vector<8x128xbf16>, vector<128x128xbf16>, vector<8x128xf32> -> vector<8x128xf32>
    %c0_9 = arith.constant 0 : index
    %c0_10 = arith.constant 0 : index
    %12 = vector.load %arg5[%c0_9, %c0_10] : memref<1x128xf32, #tpu.memory_space<vmem>>, vector<1x128xf32>
    %13 = vector.broadcast %12 : vector<1x128xf32> to vector<8x128xf32>
    %14 = arith.addf %11, %13 : vector<8x128xf32>
    %cst_11 = arith.constant 0.000000e+00 : f32
    %15 = vector.broadcast %cst_11 : f32 to vector<8x128xf32>
    %16 = arith.maximumf %14, %15 : vector<8x128xf32>
    %17 = arith.truncf %16 : vector<8x128xf32> to vector<8x128xbf16>
    %c0_12 = arith.constant 0 : index
    %c0_13 = arith.constant 0 : index
    %18 = vector.load %arg6[%c0_12, %c0_13] : memref<128x128xbf16, #tpu.memory_space<vmem>>, vector<128x128xbf16>
    %cst_14 = arith.constant dense<0.000000e+00> : vector<8x128xf32>
    %19 = tpu.matmul %17, %18, %cst_14 {dimension_numbers = #tpu.dot_dimension_numbers<[1], [0], [0], [1], [0, 0, 1, 1], [], []>} : vector<8x128xbf16>, vector<128x128xbf16>, vector<8x128xf32> -> vector<8x128xf32>
    %c0_15 = arith.constant 0 : index
    %c0_16 = arith.constant 0 : index
    %20 = vector.load %arg7[%c0_15, %c0_16] : memref<1x128xf32, #tpu.memory_space<vmem>>, vector<1x128xf32>
    %21 = vector.broadcast %20 : vector<1x128xf32> to vector<8x128xf32>
    %22 = arith.addf %19, %21 : vector<8x128xf32>
    %23 = arith.truncf %22 : vector<8x128xf32> to vector<8x128xbf16>
    %c0_17 = arith.constant 0 : index
    %c0_18 = arith.constant 0 : index
    %24 = vector.load %arg8[%c0_17, %c0_18] : memref<8x128xbf16, #tpu.memory_space<vmem>>, vector<8x128xbf16>
    tpu.vector_store %arg8[%c0_17, %c0_18], %23 {strides = array<i32>} : memref<8x128xbf16, #tpu.memory_space<vmem>>, vector<8x128xbf16>,
    return
  }
  func.func @transform_0(%arg0: i32) -> (i32, i32) {
    %c0_i32 = arith.constant 0 : i32
    %c0_i32_0 = arith.constant 0 : i32
    return %arg0, %c0_i32 : i32, i32
  }
  func.func @transform_1(%arg0: i32) -> (i32, i32) {
    %c0_i32 = arith.constant 0 : i32
    %c0_i32_0 = arith.constant 0 : i32
    %c0_i32_1 = arith.constant 0 : i32
    return %c0_i32, %c0_i32_0 : i32, i32
  }
  func.func @transform_2(%arg0: i32) -> (i32, i32) {
    %c0_i32 = arith.constant 0 : i32
    %c0_i32_0 = arith.constant 0 : i32
    %c0_i32_1 = arith.constant 0 : i32
    return %c0_i32, %c0_i32_0 : i32, i32
  }
  func.func @transform_3(%arg0: i32) -> (i32, i32) {
    %c0_i32 = arith.constant 0 : i32
    %c0_i32_0 = arith.constant 0 : i32
    %c0_i32_1 = arith.constant 0 : i32
    return %c0_i32, %c0_i32_0 : i32, i32
  }
  func.func @transform_4(%arg0: i32) -> (i32, i32) {
    %c0_i32 = arith.constant 0 : i32
    %c0_i32_0 = arith.constant 0 : i32
    %c0_i32_1 = arith.constant 0 : i32
    return %c0_i32, %c0_i32_0 : i32, i32
  }
  func.func @transform_5(%arg0: i32) -> (i32, i32) {
    %c0_i32 = arith.constant 0 : i32
    %c0_i32_0 = arith.constant 0 : i32
    %c0_i32_1 = arith.constant 0 : i32
    return %c0_i32, %c0_i32_0 : i32, i32
  }
  func.func @transform_6(%arg0: i32) -> (i32, i32) {
    %c0_i32 = arith.constant 0 : i32
    %c0_i32_0 = arith.constant 0 : i32
    %c0_i32_1 = arith.constant 0 : i32
    return %c0_i32, %c0_i32_0 : i32, i32
  }
  func.func @transform_7(%arg0: i32) -> (i32, i32) {
    %c0_i32 = arith.constant 0 : i32
    %c0_i32_0 = arith.constant 0 : i32
    return %arg0, %c0_i32 : i32, i32
  }
}

</mosaic_0001>

<llo_original>
// kernel: tpu_custom_call.1
$region0: #{tpu_custom_call.1}
  #allocation0 [shape = 'u32[]', space=smem, size = 0x4, offset = 0x4, fixed_abs, tag = 'smem constant byte address 0x4 - core index']
  #allocation1 [shape = 'u32[72,128]{1,0:T(1,128)}', space=vmem, size = 0x9000, scoped, tag = 'internal scratch']
  %s0 = inlined_call_operand.hbm [shape: f32[8,32], index: 0, kind: input, shape index: {}]
  %s1 = inlined_call_operand.hbm [shape: bf16[32,128], index: 1, kind: input, shape index: {}]
  %s2 = inlined_call_operand.vmem [shape: f32[1,128], index: 2, kind: input, shape index: {}]
  %s3 = inlined_call_operand.hbm [shape: bf16[128,128], index: 3, kind: input, shape index: {}]
  %s4 = inlined_call_operand.vmem [shape: f32[1,128], index: 4, kind: input, shape index: {}]
  %s5 = inlined_call_operand.hbm [shape: bf16[128,128], index: 5, kind: input, shape index: {}]
  %s6 = inlined_call_operand.vmem [shape: f32[1,128], index: 6, kind: input, shape index: {}]
  %s7 = inlined_call_operand.hbm [shape: bf16[8,128], index: 7, kind: output, shape index: {}]
  %s8 = sld [smem:[#allocation0]]
  $region54: #{tpu_custom_call.1} parent=0
    _
  %s10 = ssub.s32 1, %s8
  %s11 = scalar_select 0, %s10, %s8
  $region1: #{tpu_custom_call.1} parent=0
    #allocation2 [shape = 'u8[4096]{0}', space=vmem, size = 0x1000, scoped, tag = 'input window, operand 0, single buffered']
    #allocation3 [shape = 's32[1]{0}', space=sflag, size = 0x4, scoped, tag = 'scoped memory for tpu_custom_call.1']
    #allocation4 [shape = 's32[1]{0}', space=sflag, size = 0x4, scoped, tag = 'scoped memory for tpu_custom_call.1']
    #allocation5 [shape = 'u8[8192]{0}', space=vmem, size = 0x2000, scoped, tag = 'input window, operand 1, single buffered']
    #allocation6 [shape = 's32[1]{0}', space=sflag, size = 0x4, scoped, tag = 'scoped memory for tpu_custom_call.1']
    #allocation7 [shape = 'u8[32768]{0}', space=vmem, size = 0x8000, scoped, tag = 'input window, operand 3, single buffered']
    #allocation8 [shape = 'u8[32768]{0}', space=vmem, size = 0x8000, scoped, tag = 'input window, operand 5, single buffered']
    #allocation9 [shape = 's32[1]{0}', space=sflag, size = 0x4, scoped, tag = 'scoped memory for tpu_custom_call.1']
    #allocation10 [shape = 'u8[2048]{0}', space=vmem, size = 0x800, scoped, tag = 'output window, operand 0, single buffered']
    %12 = vsyncpa [#allocation3], 0
    %13 = vsyncpa [#allocation6], 0
    %14 = vsyncpa [#allocation9], 0
    %15 = vsyncpa [#allocation4], 0
    // Predicated region
    $region2: #{tpu_custom_call.1} parent=1 // pred_check
      _
    $region3: #{tpu_custom_call.1} parent=1 // pred_check_branch
      %17 = sbr.rel (0) target = $region5
    $region4: #{tpu_custom_call.1} parent=1 // pred_region
      %19 = vsyncadd [#allocation3], 0
      %s21 = sshll.u32 %s0, 4
      %s22 = int_to_ptr.hbm [resolvable:$true] %s21
      %s23 = sshll.u32 [#allocation2], 4
      %s24 = int_to_ptr.vmem [resolvable:$true] %s23
      %26 = dma.hbm_to_vmem [thread:$0]  %s22, 128, %s24, [#allocation3]
    $region5: #{tpu_custom_call.1} parent=1 // pred_fallthru
      _
    // Predicated region
    $region6: #{tpu_custom_call.1} parent=1 // pred_check
      _
    $region7: #{tpu_custom_call.1} parent=1 // pred_check_branch
      %28 = sbr.rel (0) target = $region9
    $region8: #{tpu_custom_call.1} parent=1 // pred_region
      %30 = vsyncadd [#allocation6], 0
      %s31 = sshll.u32 %s1, 4
      %s32 = int_to_ptr.hbm [resolvable:$true] %s31
      %s33 = sshll.u32 [#allocation5], 4
      %s34 = int_to_ptr.vmem [resolvable:$true] %s33
      %39 = dma.hbm_to_vmem [thread:$0]  %s32, 256, %s34, [#allocation6], 64, 64, 4
    $region9: #{tpu_custom_call.1} parent=1 // pred_fallthru
      _
    // Predicated region
    $region10: #{tpu_custom_call.1} parent=1 // pred_check
      _
    $region11: #{tpu_custom_call.1} parent=1 // pred_check_branch
      %41 = sbr.rel (0) target = $region13
    $region12: #{tpu_custom_call.1} parent=1 // pred_region
      _
    $region13: #{tpu_custom_call.1} parent=1 // pred_fallthru
      _
    // Predicated region
    $region14: #{tpu_custom_call.1} parent=1 // pred_check
      _
    $region15: #{tpu_custom_call.1} parent=1 // pred_check_branch
      %43 = sbr.rel (0) target = $region17
    $region16: #{tpu_custom_call.1} parent=1 // pred_region
      %45 = vsyncadd [#allocation6], 0
      %s46 = sshll.u32 %s3, 4
      %s47 = int_to_ptr.hbm [resolvable:$true] %s46
      %s48 = sshll.u32 [#allocation7], 4
      %s49 = int_to_ptr.vmem [resolvable:$true] %s48
      %54 = dma.hbm_to_vmem [thread:$0]  %s47, 1024, %s49, [#allocation6], 64, 64, 4
    $region17: #{tpu_custom_call.1} parent=1 // pred_fallthru
      _
    // Predicated region
    $region18: #{tpu_custom_call.1} parent=1 // pred_check
      _
    $region19: #{tpu_custom_call.1} parent=1 // pred_check_branch
      %56 = sbr.rel (0) target = $region21
    $region20: #{tpu_custom_call.1} parent=1 // pred_region
      _
    $region21: #{tpu_custom_call.1} parent=1 // pred_fallthru
      _
    // Predicated region
    $region22: #{tpu_custom_call.1} parent=1 // pred_check
      _
    $region23: #{tpu_custom_call.1} parent=1 // pred_check_branch
      %58 = sbr.rel (0) target = $region25
    $region24: #{tpu_custom_call.1} parent=1 // pred_region
      %60 = vsyncadd [#allocation9], 0
      %s61 = sshll.u32 %s5, 4
      %s62 = int_to_ptr.hbm [resolvable:$true] %s61
      %s63 = sshll.u32 [#allocation8], 4
      %s64 = int_to_ptr.vmem [resolvable:$true] %s63
      %69 = dma.hbm_to_vmem [thread:$0]  %s62, 1024, %s64, [#allocation9], 64, 64, 4
    $region25: #{tpu_custom_call.1} parent=1 // pred_fallthru
      _
    // Predicated region
    $region26: #{tpu_custom_call.1} parent=1 // pred_check
      _
    $region27: #{tpu_custom_call.1} parent=1 // pred_check_branch
      %71 = sbr.rel (0) target = $region29
    $region28: #{tpu_custom_call.1} parent=1 // pred_region
      _
    $region29: #{tpu_custom_call.1} parent=1 // pred_fallthru
      _
    // Predicated region
    $region30: #{tpu_custom_call.1} parent=1 // pred_check
      _
    $region31: #{tpu_custom_call.1} parent=1 // pred_check_branch
      %73 = sbr.rel (0) target = $region33
    $region32: #{tpu_custom_call.1} parent=1 // pred_region
      %75 = dma.done [#allocation3], 128
    $region33: #{tpu_custom_call.1} parent=1 // pred_fallthru
      _
    // Predicated region
    $region34: #{tpu_custom_call.1} parent=1 // pred_check
      _
    $region35: #{tpu_custom_call.1} parent=1 // pred_check_branch
      %77 = sbr.rel (0) target = $region37
    $region36: #{tpu_custom_call.1} parent=1 // pred_region
      %79 = dma.done [#allocation6], 256
    $region37: #{tpu_custom_call.1} parent=1 // pred_fallthru
      _
    // Predicated region
    $region38: #{tpu_custom_call.1} parent=1 // pred_check
      _
    $region39: #{tpu_custom_call.1} parent=1 // pred_check_branch
      %81 = sbr.rel (0) target = $region41
    $region40: #{tpu_custom_call.1} parent=1 // pred_region
      %83 = dma.done [#allocation6], 1024
    $region41: #{tpu_custom_call.1} parent=1 // pred_fallthru
      _
    // Predicated region
    $region42: #{tpu_custom_call.1} parent=1 // pred_check
      _
    $region43: #{tpu_custom_call.1} parent=1 // pred_check_branch
      %85 = sbr.rel (0) target = $region45
    $region44: #{tpu_custom_call.1} parent=1 // pred_region
      %87 = dma.done [#allocation9], 1024
    $region45: #{tpu_custom_call.1} parent=1 // pred_fallthru
      _
    %v89 = vld [vmem:[#allocation2] sm:$0xff]
    %v90 = vpack.c.bf16 %v89, %v89
    %v91 = vld [vmem:[#allocation5] sm:$0xf]
    %v92 = vld [vmem:[#allocation5 + $0x4] sm:$0xf]
    %v93 = vld [vmem:[#allocation5 + $0x8] sm:$0xf]
    %v94 = vld [vmem:[#allocation5 + $0xc] sm:$0xf]
    %v95 = vld [vmem:[%s2] sm:$0x1]
    %v97 = vperm.slane %v95, 0
    %v103 = vunpack.c.l.b16 %v91
    %v104 = vunpack.c.l.b16 %v92
    %v105 = vunpack.c.l.b16 %v93
    %v106 = vunpack.c.l.b16 %v94
    %v107 = vpack.c.b16 %v104, %v103
    %v108 = vpack.c.b16 %v106, %v105
    %vm111 = vcmask 261120
    %v113 = vsel %vm111, %v90, 0
    %115 = vmatpush.bf16.msra.mxu0 0
    %116 = vmatpush.bf16.msra.mxu0 0
    %117 = vmatpush.bf16.msra.mxu0 0
    %118 = vmatpush.bf16.msra.mxu0 0
    %119 = vmatpush.bf16.msra.mxu0 0
    %120 = vmatpush.bf16.msra.mxu0 0
    %121 = vmatpush.bf16.msra.mxu0 %v108
    %122 = vmatpush.bf16.msra.mxu0 %v107
    %123 = vmatmul.bf16.gmra.mxu0 %v113
    %v124 = vpop.f32.mrf.mxu0
    %v125 = vadd.f32 %v97, %v124
    %v126 = vpop.f32.mrf.mxu0
    %127 = vdwg.mxu0
    %v128 = vmax.f32 %v125, 0.0
    %v129 = vpack.c.bf16 %v128, %v128
    %v130 = vld [vmem:[#allocation7] sm:$0xf]
    %v131 = vld [vmem:[#allocation7 + $0x4] sm:$0xf]
    %v132 = vld [vmem:[#allocation7 + $0x8] sm:$0xf]
    %v133 = vld [vmem:[#allocation7 + $0xc] sm:$0xf]
    %v134 = vld [vmem:[#allocation7 + $0x10] sm:$0xf]
    %v135 = vld [vmem:[#allocation7 + $0x14] sm:$0xf]
    %v136 = vld [vmem:[#allocation7 + $0x18] sm:$0xf]
    %v137 = vld [vmem:[#allocation7 + $0x1c] sm:$0xf]
    %v138 = vld [vmem:[#allocation7 + $0x20] sm:$0xf]
    %v139 = vld [vmem:[#allocation7 + $0x24] sm:$0xf]
    %v140 = vld [vmem:[#allocation7 + $0x28] sm:$0xf]
    %v141 = vld [vmem:[#allocation7 + $0x2c] sm:$0xf]
    %v142 = vld [vmem:[#allocation7 + $0x30] sm:$0xf]
    %v143 = vld [vmem:[#allocation7 + $0x34] sm:$0xf]
    %v144 = vld [vmem:[#allocation7 + $0x38] sm:$0xf]
    %v145 = vld [vmem:[#allocation7 + $0x3c] sm:$0xf]
    %v146 = vld [vmem:[%s4] sm:$0x1]
    %v148 = vperm.slane %v146, 0
    %v166 = vunpack.c.l.b16 %v130
    %v167 = vunpack.c.l.b16 %v131
    %v168 = vunpack.c.l.b16 %v132
    %v169 = vunpack.c.l.b16 %v133
    %v170 = vunpack.c.l.b16 %v134
    %v171 = vunpack.c.l.b16 %v135
    %v172 = vunpack.c.l.b16 %v136
    %v173 = vunpack.c.l.b16 %v137
    %v174 = vunpack.c.l.b16 %v138
    %v175 = vunpack.c.l.b16 %v139
    %v176 = vunpack.c.l.b16 %v140
    %v177 = vunpack.c.l.b16 %v141
    %v178 = vunpack.c.l.b16 %v142
    %v179 = vunpack.c.l.b16 %v143
    %v180 = vunpack.c.l.b16 %v144
    %v181 = vunpack.c.l.b16 %v145
    %v182 = vpack.c.b16 %v167, %v166
    %v183 = vpack.c.b16 %v169, %v168
    %v184 = vpack.c.b16 %v171, %v170
    %v185 = vpack.c.b16 %v173, %v172
    %v186 = vpack.c.b16 %v175, %v174
    %v187 = vpack.c.b16 %v177, %v176
    %v188 = vpack.c.b16 %v179, %v178
    %v189 = vpack.c.b16 %v181, %v180
    %198 = vmatpush.bf16.msra.mxu0 %v189
    %199 = vmatpush.bf16.msra.mxu0 %v188
    %200 = vmatpush.bf16.msra.mxu0 %v187
    %201 = vmatpush.bf16.msra.mxu0 %v186
    %202 = vmatpush.bf16.msra.mxu0 %v185
    %203 = vmatpush.bf16.msra.mxu0 %v184
    %204 = vmatpush.bf16.msra.mxu0 %v183
    %205 = vmatpush.bf16.msra.mxu0 %v182
    %206 = vmatmul.bf16.gmra.mxu0 %v129
    %v207 = vpop.f32.mrf.mxu0
    %v208 = vadd.f32 %v148, %v207
    %v209 = vpop.f32.mrf.mxu0
    %210 = vdwg.mxu0
    %v211 = vmax.f32 %v208, 0.0
    %v212 = vpack.c.bf16 %v211, %v211
    %v213 = vld [vmem:[#allocation8] sm:$0xf]
    %v214 = vld [vmem:[#allocation8 + $0x4] sm:$0xf]
    %v215 = vld [vmem:[#allocation8 + $0x8] sm:$0xf]
    %v216 = vld [vmem:[#allocation8 + $0xc] sm:$0xf]
    %v217 = vld [vmem:[#allocation8 + $0x10] sm:$0xf]
    %v218 = vld [vmem:[#allocation8 + $0x14] sm:$0xf]
    %v219 = vld [vmem:[#allocation8 + $0x18] sm:$0xf]
    %v220 = vld [vmem:[#allocation8 + $0x1c] sm:$0xf]
    %v221 = vld [vmem:[#allocation8 + $0x20] sm:$0xf]
    %v222 = vld [vmem:[#allocation8 + $0x24] sm:$0xf]
    %v223 = vld [vmem:[#allocation8 + $0x28] sm:$0xf]
    %v224 = vld [vmem:[#allocation8 + $0x2c] sm:$0xf]
    %v225 = vld [vmem:[#allocation8 + $0x30] sm:$0xf]
    %v226 = vld [vmem:[#allocation8 + $0x34] sm:$0xf]
    %v227 = vld [vmem:[#allocation8 + $0x38] sm:$0xf]
    %v228 = vld [vmem:[#allocation8 + $0x3c] sm:$0xf]
    %v229 = vld [vmem:[%s6] sm:$0x1]
    %v231 = vperm.slane %v229, 0
    %v249 = vunpack.c.l.b16 %v213
    %v250 = vunpack.c.l.b16 %v214
    %v251 = vunpack.c.l.b16 %v215
    %v252 = vunpack.c.l.b16 %v216
    %v253 = vunpack.c.l.b16 %v217
    %v254 = vunpack.c.l.b16 %v218
    %v255 = vunpack.c.l.b16 %v219
    %v256 = vunpack.c.l.b16 %v220
    %v257 = vunpack.c.l.b16 %v221
    %v258 = vunpack.c.l.b16 %v222
    %v259 = vunpack.c.l.b16 %v223
    %v260 = vunpack.c.l.b16 %v224
    %v261 = vunpack.c.l.b16 %v225
    %v262 = vunpack.c.l.b16 %v226
    %v263 = vunpack.c.l.b16 %v227
    %v264 = vunpack.c.l.b16 %v228
    %v265 = vpack.c.b16 %v250, %v249
    %v266 = vpack.c.b16 %v252, %v251
    %v267 = vpack.c.b16 %v254, %v253
    %v268 = vpack.c.b16 %v256, %v255
    %v269 = vpack.c.b16 %v258, %v257
    %v270 = vpack.c.b16 %v260, %v259
    %v271 = vpack.c.b16 %v262, %v261
    %v272 = vpack.c.b16 %v264, %v263
    %281 = vmatpush.bf16.msra.mxu0 %v272
    %282 = vmatpush.bf16.msra.mxu0 %v271
    %283 = vmatpush.bf16.msra.mxu0 %v270
    %284 = vmatpush.bf16.msra.mxu0 %v269
    %285 = vmatpush.bf16.msra.mxu0 %v268
    %286 = vmatpush.bf16.msra.mxu0 %v267
    %287 = vmatpush.bf16.msra.mxu0 %v266
    %288 = vmatpush.bf16.msra.mxu0 %v265
    %289 = vmatmul.bf16.gmra.mxu0 %v212
    %v290 = vpop.f32.mrf.mxu0
    %v291 = vadd.f32 %v231, %v290
    %v292 = vpop.f32.mrf.mxu0
    %293 = vdwg.mxu0
    %v294 = vpack.c.bf16 %v291, %v291
    %295 = vst [vmem:[#allocation10] sm:$0xf] %v294
    // Predicated region
    $region46: #{tpu_custom_call.1} parent=1 // pred_check
      _
    $region47: #{tpu_custom_call.1} parent=1 // pred_check_branch
      %297 = sbr.rel (0) target = $region49
    $region48: #{tpu_custom_call.1} parent=1 // pred_region
      %299 = vsyncadd [#allocation4], 0
      %s301 = sshll.u32 [#allocation10], 4
      %s302 = int_to_ptr.vmem [resolvable:$true] %s301
      %s303 = sshll.u32 %s7, 4
      %s304 = int_to_ptr.hbm [resolvable:$true] %s303
      %306 = dma.vmem_to_hbm [thread:$0]  %s302, 64, %s304, [#allocation4]
    $region49: #{tpu_custom_call.1} parent=1 // pred_fallthru
      _
    // Predicated region
    $region50: #{tpu_custom_call.1} parent=1 // pred_check
      _
    $region51: #{tpu_custom_call.1} parent=1 // pred_check_branch
      %308 = sbr.rel (0) target = $region53
    $region52: #{tpu_custom_call.1} parent=1 // pred_region
      %310 = dma.done [#allocation4], 64
    $region53: #{tpu_custom_call.1} parent=1 // pred_fallthru
      _
    %311 = vsyncpa [#allocation3], 1
    %312 = vsyncpa [#allocation6], 1
    %313 = vsyncpa [#allocation9], 1
    %314 = vsyncpa [#allocation4], 1

</llo_original>
